<compile_context>
chip_gen: v5e
topology: v5e:2x2
jax: 0.10.0
libtpu: 0.0.40
codegen_flags: <defaults>
</compile_context>

<pallas_src>
import functools

import jax
import jax.numpy as jnp
from jax import lax
from jax.experimental import pallas as pl
from jax.experimental.pallas import tpu as pltpu


def _round_up(x, m):
    return ((x + m - 1) // m) * m


def _tpu_vmem_bytes():
    try:
        info = pltpu.get_tpu_info()
        return int(getattr(info, "vmem_capacity_bytes", 64 * 2**20))
    except Exception:
        return 64 * 2**20            # conservative fallback (v7x-sized)


def _tensorcores_per_chip():
    try:
        kind = jax.devices()[0].device_kind.lower()
    except Exception:
        return 1
    return 2 if "v7" in kind else 1  # v5e / v6e expose a single TensorCore


def _contrastive_loss_kernel(o1_ref, o2_ref, t_ref, out_ref, *, margin, eps,
                             batch, tiles_per_core):
    c = pl.program_id(0)
    i = pl.program_id(1)

    # The output block is resident across the reduction axis i -> zero it once.
    @pl.when(i == 0)
    def _():
        out_ref[...] = jnp.zeros_like(out_ref)

    tb = o1_ref.shape[0]
    base = (c * tiles_per_core + i) * tb           # first global row of this tile

    # Upcast in-kernel: HBM traffic stays in the native dtype.
    o1 = o1_ref[...].astype(jnp.float32)           # (tb, D)
    o2 = o2_ref[...].astype(jnp.float32)           # (tb, D)
    diff = o2 - o1
    dist = jnp.sum(diff * diff, axis=1, keepdims=True)      # (tb, 1)

    # Mask the ragged tail (and fully out-of-range clamped tiles): rows >= batch
    # may contain garbage (even NaN/Inf), so zero their distances before any
    # further math so they cannot poison the reduction.
    row = base + lax.broadcasted_iota(jnp.int32, (tb, 1), 0)
    dist = jnp.where(row < batch, dist, 0.0)

    hinge = jnp.maximum(margin - jnp.sqrt(dist + eps), 0.0)  # (tb, 1)
    h2 = hinge * hinge

    # Lane-dense target row; padded / masked rows carry t == 1 so that both
    # t*dist (dist == 0) and (1 - t)*hinge^2 ((1 - t) == 0) contribute exactly 0.
    t_row = t_ref[...].reshape(1, tb)                        # (1, tb) f32

    # Per-row target weighting + tile reduction as two tiny MXU matvecs
    # ((1, tb) @ (tb, 1)); avoids any sublane<->lane relayout of the distances.
    s_same = jnp.dot(t_row, dist, preferred_element_type=jnp.float32,
                     precision=lax.Precision.HIGHEST)        # (1, 1)
    s_diff = jnp.dot(1.0 - t_row, h2, preferred_element_type=jnp.float32,
                     precision=lax.Precision.HIGHEST)        # (1, 1)

    out_ref[...] += (0.5 * (s_same + s_diff)).reshape(1, 1, 1)


def contrastive_loss(output1, output2, target, *, margin=1.0, size_average=True,
                     block_rows=None, num_core_splits=None):
    """Pallas implementation of ContrastiveLoss.forward.

    output1, output2: (B, D) embeddings, any float dtype (kept native in HBM).
    target:           (B,)   {0, 1} same-class labels.
    Returns a scalar float32 (mean over batch if size_average else sum).
    """
    B, D = output1.shape
    itemsize = jnp.dtype(output1.dtype).itemsize

    multi_tc = _tensorcores_per_chip() > 1
    vmem_bytes = min(_tpu_vmem_bytes(), 128 * 2**20)
    if multi_tc:                                   # v7x: 64 MiB per TensorCore
        vmem_bytes = min(vmem_bytes, 64 * 2**20)
    budget = (vmem_bytes * 3) // 4                 # working-set budget (~75%)
    vmem_limit = (vmem_bytes * 85) // 100          # leave headroom for internals

    # Per batch-row VMEM cost: double-buffered native o1/o2 blocks, ~3 live f32
    # (tb, D) temporaries, ~6 live lane-padded (tb, 1) column temporaries and the
    # (sublane-padded) lane-dense target row.
    sub = max(8, 32 // itemsize)                   # sublane multiple per dtype
    bytes_per_row = (2 * 2 * D * itemsize) + (3 * D * 4) + (6 * 128 * 4) + (2 * 8 * 4)
    max_tb = max(sub, budget // bytes_per_row)
    tb = min(int(max_tb), _round_up(B, sub))
    if block_rows is not None:                     # only honor explicit caps
        tb = min(tb, int(block_rows))
    tb = max(sub, (tb // sub) * sub)

    nt_needed = -(-B // tb)                        # ceil(B / tb) real tiles
    nc = (_tensorcores_per_chip() if num_core_splits is None
          else max(1, int(num_core_splits)))
    nc = min(nc, nt_needed)
    nt = -(-nt_needed // nc)                       # tiles per core split
    n_tiles = nc * nt
    last_tile = nt_needed - 1

    # Only the tiny target vector is ever padded/copied (never the embeddings);
    # padded rows get t = 1 so they contribute exactly zero (see kernel).
    t = target.astype(jnp.float32).reshape(B)
    pad = n_tiles * tb - B
    if pad:
        t = jnp.pad(t, (0, pad), constant_values=1.0)
    t = t.reshape(n_tiles, 1, tb)                  # lane-dense (1, 1, tb) blocks

    def emb_map(c, i):
        # Clamp so surplus tiles from the core split re-read the last real tile;
        # their rows are fully masked in the kernel, so the data is irrelevant.
        return (jnp.minimum(c * nt + i, last_tile), 0)

    def tgt_map(c, i):
        return (c * nt + i, 0, 0)

    def out_map(c, i):
        return (c, 0, 0)

    if nc > 1 and multi_tc:
        lead_sem = getattr(pltpu, "CORE_PARALLEL", pltpu.PARALLEL)  # shard across v7x TCs
    elif nc > 1:
        lead_sem = pltpu.PARALLEL
    else:
        lead_sem = pltpu.ARBITRARY

    kernel = functools.partial(_contrastive_loss_kernel, margin=float(margin),
                               eps=1e-9, batch=B, tiles_per_core=nt)

    # TODO(synk): for extremely large D (hundreds of thousands+), add an inner
    # grid axis over D with a per-row partial-sum so the tile footprint stays
    # bounded independent of D.
    # TODO(synk): if an xprof trace on v7x shows DMA bubbles at tile boundaries,
    # add pipeline_mode=pl.Buffered(3) to the two embedding BlockSpecs.
    partials = pl.pallas_call(
        kernel,
        out_shape=jax.ShapeDtypeStruct((nc, 1, 1), jnp.float32),
        grid_spec=pltpu.PrefetchScalarGridSpec(
            num_scalar_prefetch=0,
            grid=(nc, nt),
            in_specs=[
                pl.BlockSpec((tb, D), emb_map),
                pl.BlockSpec((tb, D), emb_map),
                pl.BlockSpec((1, 1, tb), tgt_map),
            ],
            out_specs=pl.BlockSpec((1, 1, 1), out_map),
        ),
        compiler_params=pltpu.CompilerParams(
            dimension_semantics=(lead_sem, pltpu.ARBITRARY),
            vmem_limit_bytes=int(vmem_limit),
        ),
    )(output1, output2, t)

    total = jnp.sum(partials)
    return total / B if size_average else total


def _contrastive_loss_ref(output1, output2, target, *, margin=1.0,
                          size_average=True, eps=1e-9):
    # Pure-JAX reference mirroring the PyTorch forward exactly (f32 math).
    o1 = output1.astype(jnp.float32)
    o2 = output2.astype(jnp.float32)
    distances = jnp.sum((o2 - o1) ** 2, axis=1)
    tf = target.astype(jnp.float32)
    hinge = jnp.maximum(margin - jnp.sqrt(distances + eps), 0.0)
    losses = 0.5 * (tf * distances + (1.0 - tf) * hinge ** 2)
    return jnp.mean(losses) if size_average else jnp.sum(losses)


if __name__ == "__main__":
    key = jax.random.PRNGKey(0)
    k1, k2, k3, k4, k5, k6, k7, k8, k9 = jax.random.split(key, 9)

    # 1) Small siamese-embedding example: batch=8, hidden=32, float32, mean.
    B, D = 8, 32
    o1 = jax.random.normal(k1, (B, D), dtype=jnp.float32)
    o2 = jax.random.normal(k2, (B, D), dtype=jnp.float32)
    tgt = jax.random.bernoulli(k3, 0.5, (B,)).astype(jnp.int32)

    loss = jax.block_until_ready(contrastive_loss(o1, o2, tgt, margin=1.0))
    ref = _contrastive_loss_ref(o1, o2, tgt, margin=1.0)
    assert jnp.allclose(loss, ref, atol=1e-4, rtol=1e-4), (loss, ref)

    # 2) size_average=False (sum) path.
    loss_s = jax.block_until_ready(
        contrastive_loss(o1, o2, tgt, margin=1.0, size_average=False))
    ref_s = _contrastive_loss_ref(o1, o2, tgt, margin=1.0, size_average=False)
    assert jnp.allclose(loss_s, ref_s, atol=1e-4, rtol=1e-4), (loss_s, ref_s)

    # 3) Ragged batch + multi-tile + native bf16 inputs (exercises in-kernel
    #    tail masking and the lane-dense target stream).
    B2, D2 = 50, 64
    o1b = jax.random.normal(k4, (B2, D2), dtype=jnp.bfloat16)
    o2b = jax.random.normal(k5, (B2, D2), dtype=jnp.bfloat16)
    tgt2 = jax.random.bernoulli(k6, 0.5, (B2,)).astype(jnp.int32)
    loss2 = jax.block_until_ready(
        contrastive_loss(o1b, o2b, tgt2, margin=1.0, block_rows=16))
    ref2 = _contrastive_loss_ref(o1b, o2b, tgt2, margin=1.0)
    assert jnp.allclose(loss2, ref2, atol=1e-3, rtol=1e-3), (loss2, ref2)

    # 4) Explicit 2-way core split with an odd number of real tiles (exercises
    #    the clamped index_map and a fully masked surplus tile).
    B3, D3 = 20, 32
    o1c = jax.random.normal(k7, (B3, D3), dtype=jnp.float32)
    o2c = jax.random.normal(k8, (B3, D3), dtype=jnp.float32)
    tgt3 = jax.random.bernoulli(k9, 0.5, (B3,)).astype(jnp.int32)
    loss3 = jax.block_until_ready(
        contrastive_loss(o1c, o2c, tgt3, margin=1.0, block_rows=8,
                         num_core_splits=2))
    ref3 = _contrastive_loss_ref(o1c, o2c, tgt3, margin=1.0)
    assert jnp.allclose(loss3, ref3, atol=1e-4, rtol=1e-4), (loss3, ref3)

    print("KERNEL_OK")
</pallas_src>

<mosaic_0001>
module attributes {stable_mosaic.version = 11 : i64} {
  func.func @_contrastive_loss_kernel(%arg0: i32, %arg1: i32, %arg2: memref<8x32xf32, #tpu.memory_space<vmem>>, %arg3: memref<8x32xf32, #tpu.memory_space<vmem>>, %arg4: memref<1x1x8xf32, #tpu.memory_space<vmem>>, %arg5: memref<1x1x1xf32, #tpu.memory_space<vmem>>) attributes {dimension_semantics = [#tpu.dimension_semantics<arbitrary>, #tpu.dimension_semantics<arbitrary>], iteration_bounds = array<i64: 1, 1>, scalar_prefetch = 0 : i64, scratch_operands = 0 : i64, tpu.core_type = #tpu.core_type<tc>, window_params = [{transform_indices = @transform_0, window_bounds = array<i64: 8, 32>}, {transform_indices = @transform_1, window_bounds = array<i64: 8, 32>}, {transform_indices = @transform_2, window_bounds = array<i64: 1, 1, 8>}, {transform_indices = @transform_3, window_bounds = array<i64: 1, 1, 1>}]} {
    %c0_i32 = arith.constant 0 : i32
    %0 = arith.cmpi eq, %arg1, %c0_i32 : i32
    %1 = arith.extui %0 : i1 to i32
    %c0_i32_0 = arith.constant 0 : i32
    %2 = arith.cmpi ne, %1, %c0_i32_0 : i32
    scf.if %2 {
      %cst_22 = arith.constant 0.000000e+00 : f32
      %40 = vector.broadcast %cst_22 : f32 to vector<1x1x1xf32>
      %c0_23 = arith.constant 0 : index
      %c0_24 = arith.constant 0 : index
      %c0_25 = arith.constant 0 : index
      %41 = vector.load %arg5[%c0_23, %c0_24, %c0_25] : memref<1x1x1xf32, #tpu.memory_space<vmem>>, vector<1x1x1xf32>
      tpu.vector_store %arg5[%c0_23, %c0_24, %c0_25], %40 {strides = array<i32>} : memref<1x1x1xf32, #tpu.memory_space<vmem>>, vector<1x1x1xf32>,
    } else {
    }
    %c1_i32 = arith.constant 1 : i32
    %3 = arith.muli %arg0, %c1_i32 : i32
    %4 = arith.addi %3, %arg1 : i32
    %c8_i32 = arith.constant 8 : i32
    %5 = arith.muli %4, %c8_i32 : i32
    %c0 = arith.constant 0 : index
    %c0_1 = arith.constant 0 : index
    %6 = vector.load %arg2[%c0, %c0_1] : memref<8x32xf32, #tpu.memory_space<vmem>>, vector<8x32xf32>
    %c0_2 = arith.constant 0 : index
    %c0_3 = arith.constant 0 : index
    %7 = vector.load %arg3[%c0_2, %c0_3] : memref<8x32xf32, #tpu.memory_space<vmem>>, vector<8x32xf32>
    %8 = arith.subf %7, %6 : vector<8x32xf32>
    %9 = arith.mulf %8, %8 : vector<8x32xf32>
    %cst = arith.constant dense<0.000000e+00> : vector<8xf32>
    %10 = vector.multi_reduction <add>, %9, %cst [1] : vector<8x32xf32> to vector<8xf32>
    %11 = vector.shape_cast %10 : vector<8xf32> to vector<8x1xf32>
    %12 = tpu.iota {dimensions = array<i32: 0>} : vector<8x1xi32>
    %13 = vector.broadcast %5 : i32 to vector<8x1xi32>
    %14 = arith.addi %13, %12 : vector<8x1xi32>
    %c8_i32_4 = arith.constant 8 : i32
    %15 = vector.broadcast %c8_i32_4 : i32 to vector<8x1xi32>
    %16 = arith.cmpi slt, %14, %15 : vector<8x1xi32>
    %cst_5 = arith.constant 0.000000e+00 : f32
    %17 = vector.broadcast %cst_5 : f32 to vector<8x1xf32>
    %18 = arith.select %16, %11, %17 : vector<8x1xi1>, vector<8x1xf32>
    %cst_6 = arith.constant 9.99999971E-10 : f32
    %19 = vector.broadcast %cst_6 : f32 to vector<8x1xf32>
    %20 = arith.addf %18, %19 : vector<8x1xf32>
    %21 = math.sqrt %20 : vector<8x1xf32>
    %cst_7 = arith.constant 1.000000e+00 : f32
    %22 = vector.broadcast %cst_7 : f32 to vector<8x1xf32>
    %23 = arith.subf %22, %21 : vector<8x1xf32>
    %cst_8 = arith.constant 0.000000e+00 : f32
    %24 = vector.broadcast %cst_8 : f32 to vector<8x1xf32>
    %25 = arith.maximumf %23, %24 : vector<8x1xf32>
    %26 = arith.mulf %25, %25 : vector<8x1xf32>
    %c0_9 = arith.constant 0 : index
    %c0_10 = arith.constant 0 : index
    %c0_11 = arith.constant 0 : index
    %27 = vector.load %arg4[%c0_9, %c0_10, %c0_11] : memref<1x1x8xf32, #tpu.memory_space<vmem>>, vector<1x1x8xf32>
    %28 = vector.shape_cast %27 : vector<1x1x8xf32> to vector<1x8xf32>
    %cst_12 = arith.constant dense<0.000000e+00> : vector<1x1xf32>
    %29 = tpu.matmul %28, %18, %cst_12 {dimension_numbers = #tpu.dot_dimension_numbers<[1], [0], [0], [1], [0, 0, 1, 1], [], []>, precision = #tpu.contract_precision<fp32>} : vector<1x8xf32>, vector<8x1xf32>, vector<1x1xf32> -> vector<1x1xf32>
    %cst_13 = arith.constant 1.000000e+00 : f32
    %30 = vector.broadcast %cst_13 : f32 to vector<1x8xf32>
    %31 = arith.subf %30, %28 : vector<1x8xf32>
    %cst_14 = arith.constant dense<0.000000e+00> : vector<1x1xf32>
    %32 = tpu.matmul %31, %26, %cst_14 {dimension_numbers = #tpu.dot_dimension_numbers<[1], [0], [0], [1], [0, 0, 1, 1], [], []>, precision = #tpu.contract_precision<fp32>} : vector<1x8xf32>, vector<8x1xf32>, vector<1x1xf32> -> vector<1x1xf32>
    %c0_15 = arith.constant 0 : index
    %c0_16 = arith.constant 0 : index
    %c0_17 = arith.constant 0 : index
    %33 = vector.load %arg5[%c0_15, %c0_16, %c0_17] : memref<1x1x1xf32, #tpu.memory_space<vmem>>, vector<1x1x1xf32>
    %34 = arith.addf %29, %32 : vector<1x1xf32>
    %cst_18 = arith.constant 5.000000e-01 : f32
    %35 = vector.broadcast %cst_18 : f32 to vector<1x1xf32>
    %36 = arith.mulf %35, %34 : vector<1x1xf32>
    %37 = vector.shape_cast %36 : vector<1x1xf32> to vector<1x1x1xf32>
    %38 = arith.addf %33, %37 : vector<1x1x1xf32>
    %c0_19 = arith.constant 0 : index
    %c0_20 = arith.constant 0 : index
    %c0_21 = arith.constant 0 : index
    %39 = vector.load %arg5[%c0_19, %c0_20, %c0_21] : memref<1x1x1xf32, #tpu.memory_space<vmem>>, vector<1x1x1xf32>
    tpu.vector_store %arg5[%c0_19, %c0_20, %c0_21], %38 {strides = array<i32>} : memref<1x1x1xf32, #tpu.memory_space<vmem>>, vector<1x1x1xf32>,
    return
  }
  func.func @transform_0(%arg0: i32, %arg1: i32) -> (i32, i32) {
    %c1_i32 = arith.constant 1 : i32
    %0 = arith.muli %arg0, %c1_i32 : i32
    %1 = arith.addi %0, %arg1 : i32
    %c0_i32 = arith.constant 0 : i32
    %2 = arith.minsi %1, %c0_i32 : i32
    %c0_i32_0 = arith.constant 0 : i32
    %c0_i32_1 = arith.constant 0 : i32
    return %2, %c0_i32_0 : i32, i32
  }
  func.func @transform_1(%arg0: i32, %arg1: i32) -> (i32, i32) {
    %c1_i32 = arith.constant 1 : i32
    %0 = arith.muli %arg0, %c1_i32 : i32
    %1 = arith.addi %0, %arg1 : i32
    %c0_i32 = arith.constant 0 : i32
    %2 = arith.minsi %1, %c0_i32 : i32
    %c0_i32_0 = arith.constant 0 : i32
    %c0_i32_1 = arith.constant 0 : i32
    return %2, %c0_i32_0 : i32, i32
  }
  func.func @transform_2(%arg0: i32, %arg1: i32) -> (i32, i32, i32) {
    %c1_i32 = arith.constant 1 : i32
    %0 = arith.muli %arg0, %c1_i32 : i32
    %1 = arith.addi %0, %arg1 : i32
    %c0_i32 = arith.constant 0 : i32
    %c0_i32_0 = arith.constant 0 : i32
    %c0_i32_1 = arith.constant 0 : i32
    return %1, %c0_i32, %c0_i32_0 : i32, i32, i32
  }
  func.func @transform_3(%arg0: i32, %arg1: i32) -> (i32, i32, i32) {
    %c0_i32 = arith.constant 0 : i32
    %c0_i32_0 = arith.constant 0 : i32
    %c0_i32_1 = arith.constant 0 : i32
    return %arg0, %c0_i32, %c0_i32_0 : i32, i32, i32
  }
}

</mosaic_0001>

<llo_original>
// kernel: tpu_custom_call.1
$region0: #{tpu_custom_call.1}
  #allocation0 [shape = 'u32[]', space=smem, size = 0x4, offset = 0x4, fixed_abs, tag = 'smem constant byte address 0x4 - core index']
  #allocation1 [shape = 'u32[72,128]{1,0:T(1,128)}', space=vmem, size = 0x9000, scoped, tag = 'internal scratch']
  %s0 = inlined_call_operand.hbm [shape: f32[8,32], index: 0, kind: input, shape index: {}]
  %s1 = inlined_call_operand.hbm [shape: f32[8,32], index: 1, kind: input, shape index: {}]
  %s2 = inlined_call_operand.vmem [shape: f32[1,1,8], index: 2, kind: input, shape index: {}]
  %s3 = inlined_call_operand.hbm [shape: f32[1,1,1], index: 3, kind: output, shape index: {}]
  %s4 = sld [smem:[#allocation0]]
  $region34: #{tpu_custom_call.1} parent=0
    _
  %s6 = ssub.s32 1, %s4
  %s7 = scalar_select 0, %s6, %s4
  $region1: #{tpu_custom_call.1} parent=0
    #allocation2 [shape = 'u8[4096]{0}', space=vmem, size = 0x1000, scoped, tag = 'input window, operand 0, single buffered']
    #allocation3 [shape = 's32[1]{0}', space=sflag, size = 0x4, scoped, tag = 'scoped memory for tpu_custom_call.1']
    #allocation4 [shape = 's32[1]{0}', space=sflag, size = 0x4, scoped, tag = 'scoped memory for tpu_custom_call.1']
    #allocation5 [shape = 'u8[4096]{0}', space=vmem, size = 0x1000, scoped, tag = 'input window, operand 1, single buffered']
    #allocation6 [shape = 's32[1]{0}', space=sflag, size = 0x4, scoped, tag = 'scoped memory for tpu_custom_call.1']
    #allocation7 [shape = 'u8[512]{0}', space=vmem, size = 0x400, scoped, tag = 'output window, operand 0, single buffered']
    %8 = vsyncpa [#allocation3], 0
    %9 = vsyncpa [#allocation6], 0
    %10 = vsyncpa [#allocation4], 0
    // Predicated region
    $region2: #{tpu_custom_call.1} parent=1 // pred_check
      _
    $region3: #{tpu_custom_call.1} parent=1 // pred_check_branch
      %12 = sbr.rel (0) target = $region5
    $region4: #{tpu_custom_call.1} parent=1 // pred_region
      %s13 = sadd.s32 0, 0
      %p14 = scmp.lt.s32.totalorder %s13, 0
      %s15 = scalar_select %p14, %s13, 0
      %17 = vsyncadd [#allocation3], 0
      %s18 = smul.addr %s15, 8
      %s19 = scalar_lea.hbm %s0, %s18
      %s21 = sshll.u32 %s19, 4
      %s22 = int_to_ptr.hbm [resolvable:$true] %s21
      %s23 = sshll.u32 [#allocation2], 4
      %s24 = int_to_ptr.vmem [resolvable:$true] %s23
      %26 = dma.hbm_to_vmem [thread:$0]  %s22, 128, %s24, [#allocation3]
    $region5: #{tpu_custom_call.1} parent=1 // pred_fallthru
      _
    // Predicated region
    $region6: #{tpu_custom_call.1} parent=1 // pred_check
      _
    $region7: #{tpu_custom_call.1} parent=1 // pred_check_branch
      %28 = sbr.rel (0) target = $region9
    $region8: #{tpu_custom_call.1} parent=1 // pred_region
      %s29 = sadd.s32 0, 0
      %p30 = scmp.lt.s32.totalorder %s29, 0
      %s31 = scalar_select %p30, %s29, 0
      %33 = vsyncadd [#allocation6], 0
      %s34 = smul.addr %s31, 8
      %s35 = scalar_lea.hbm %s1, %s34
      %s37 = sshll.u32 %s35, 4
      %s38 = int_to_ptr.hbm [resolvable:$true] %s37
      %s39 = sshll.u32 [#allocation5], 4
      %s40 = int_to_ptr.vmem [resolvable:$true] %s39
      %42 = dma.hbm_to_vmem [thread:$0]  %s38, 128, %s40, [#allocation6]
    $region9: #{tpu_custom_call.1} parent=1 // pred_fallthru
      _
    // Predicated region
    $region10: #{tpu_custom_call.1} parent=1 // pred_check
      _
    $region11: #{tpu_custom_call.1} parent=1 // pred_check_branch
      %44 = sbr.rel (0) target = $region13
    $region12: #{tpu_custom_call.1} parent=1 // pred_region
      %s45 = sadd.s32 0, 0
      %p46 = scmp.lt.s32.totalorder %s45, 0
      %s47 = scalar_select %p46, %s45, 0
      %s48 = scalar_lea.vmem %s2, %s47
      %s49 = sadd.s32 0, 0
    $region13: #{tpu_custom_call.1} parent=1 // pred_fallthru
      _
    // Predicated region
    $region14: #{tpu_custom_call.1} parent=1 // pred_check
      _
    $region15: #{tpu_custom_call.1} parent=1 // pred_check_branch
      %51 = sbr.rel (0) target = $region17
    $region16: #{tpu_custom_call.1} parent=1 // pred_region
      %53 = dma.done [#allocation3], 128
    $region17: #{tpu_custom_call.1} parent=1 // pred_fallthru
      _
    // Predicated region
    $region18: #{tpu_custom_call.1} parent=1 // pred_check
      _
    $region19: #{tpu_custom_call.1} parent=1 // pred_check_branch
      %55 = sbr.rel (0) target = $region21
    $region20: #{tpu_custom_call.1} parent=1 // pred_region
      %57 = dma.done [#allocation6], 128
    $region21: #{tpu_custom_call.1} parent=1 // pred_fallthru
      _
    %s58 = sadd.s32 0, 0
    %p59 = scmp.lt.s32.totalorder %s58, 0
    %s60 = scalar_select %p59, %s58, 0
    %s61 = scalar_lea.vmem %s2, %s60
    %s62 = sadd.s32 0, 0
    %p63 = scmp.lt.s32.totalorder %s62, 0
    %s64 = scalar_select %p63, %s62, 0
    %s65 = sadd.s32 0, 0
    %p66 = scmp.lt.s32.totalorder %s65, 0
    %s67 = scalar_select %p66, %s65, 0
    %s68 = sadd.s32 0, 0
    %p69 = scmp.lt.s32.totalorder %s68, 0
    %s70 = scalar_select %p69, %s68, 0
    %s71 = scalar_lea.vmem %s2, %s70
    %s72 = sadd.s32 0, 0
    %p73 = scmp.eq.s32.totalorder 0, 0
    // Predicated region
    $region22: #{tpu_custom_call.1} parent=1 // pred_check
      %p74 = pneg %p73
    $region23: #{tpu_custom_call.1} parent=1 // pred_check_branch
      %76 = sbr.rel (%p74) target = $region25
    $region24: #{tpu_custom_call.1} parent=1 // pred_region
      %vm77 = vcmask 0
      %78 = vst.msk [vmem:[#allocation7] sm:$0x1] %vm77, 0.0
    $region25: #{tpu_custom_call.1} parent=1 // pred_fallthru
      _
    %s79 = sadd.s32 0, 0
    %s80 = smul.u32 %s79, 8
    %v81 = vld [vmem:[#allocation2] sm:$0xff]
    %v82 = vld [vmem:[#allocation5] sm:$0xff]
    %v83 = vsub.f32 %v82, %v81
    %v84 = vmul.f32 %v83, %v83
    %vm85 = vcmask 261120
    %v86 = vsel %vm85, %v84, 0.0
    %87 = vadd.xlane.f32.xlu0 %v86
    %v88 = vpop.xlane.xlu0 %87
    %v89 = vlaneseq
    %v90 = vshrl.u32 %v89, 7
    %v91 = vstv %s80
    %v92 = vadd.s32 %v91, %v90
    %vm93 = vcmp.lt.s32.totalorder %v92, 8
    %v94 = vsel %vm93, %v88, 0.0
    %v95 = vadd.f32 %v94, 1e-09
    %v96 = vrsqrt.pop %v95
    %v97 = vmul.f32 %v96, %v95
    %v98 = vmul.f32 %v97, %v96
    %v99 = vmul.f32 0.5, %v98
    %v100 = vsub.f32 1.5, %v99
    %v101 = vmul.f32 %v96, %v100
    %v102 = vmul.f32 %v95, %v101
    %vm103 = vcmp.eq.f32.partialorder %v95, inf
    %v104 = vsel %vm103, %v95, %v102
    %vm105 = vcmp.eq.f32.partialorder %v95, 0.0
    %v106 = vand.u32 %v95, 2147483648
    %v107 = vsel %vm105, %v106, %v104
    %v108 = vsub.f32 1.0, %v107
    %v109 = vmax.f32 %v108, 0.0
    %v110 = vmul.f32 %v109, %v109
    %v111 = vld [vmem:[%s71] sm:$0x1]
    %v112 = vsub.f32 1.0, %v111
    %vm113 = vcmask 64512
    %v115 = vsel %vm113, %v112, 0
    %117 = vmatpush.msra.mxu0 0.0
    %118 = vmatpush.msra.mxu0 0.0
    %119 = vmatpush.msra.mxu0 0.0
    %120 = vmatpush.msra.mxu0 0.0
    %121 = vmatpush.msra.mxu0 0.0
    %122 = vmatpush.msra.mxu0 0.0
    %123 = vmatpush.msra.mxu0 0.0
    %124 = vmatpush.msra.mxu0 0.0
    %125 = vmatpush.msra.mxu0 0.0
    %126 = vmatpush.msra.mxu0 0.0
    %127 = vmatpush.msra.mxu0 0.0
    %128 = vmatpush.msra.mxu0 0.0
    %129 = vmatpush.msra.mxu0 0.0
    %130 = vmatpush.msra.mxu0 0.0
    %131 = vmatpush.msra.mxu0 0.0
    %v132 = vand.u32 %v110, 4294901760
    %133 = vmatpush.msra.mxu0 %v132
    %v134 = vand.u32 %v115, 4294901760
    %v135 = vsub.f32 %v115, %v134
    %v136 = vand.u32 %v135, 4294901760
    %v137 = vsub.f32 %v135, %v136
    %v138 = vand.u32 %v137, 4294901760
    %139 = vmatmul.f32.gmra.mxu0 %v138
    %v140 = vpop.f32.mrf.mxu0
    %v141 = vadd.f32 0.0, %v140
    %142 = vdwg.mxu0
    %143 = vmatpush.msra.mxu0 0.0
    %144 = vmatpush.msra.mxu0 0.0
    %145 = vmatpush.msra.mxu0 0.0
    %146 = vmatpush.msra.mxu0 0.0
    %147 = vmatpush.msra.mxu0 0.0
    %148 = vmatpush.msra.mxu0 0.0
    %149 = vmatpush.msra.mxu0 0.0
    %150 = vmatpush.msra.mxu0 0.0
    %151 = vmatpush.msra.mxu0 0.0
    %152 = vmatpush.msra.mxu0 0.0
    %153 = vmatpush.msra.mxu0 0.0
    %154 = vmatpush.msra.mxu0 0.0
    %155 = vmatpush.msra.mxu0 0.0
    %156 = vmatpush.msra.mxu0 0.0
    %157 = vmatpush.msra.mxu0 0.0
    %v158 = vand.u32 %v110, 4294901760
    %v159 = vsub.f32 %v110, %v158
    %v160 = vand.u32 %v159, 4294901760
    %v161 = vsub.f32 %v159, %v160
    %v162 = vand.u32 %v161, 4294901760
    %163 = vmatpush.msra.mxu0 %v162
    %v164 = vand.u32 %v115, 4294901760
    %165 = vmatmul.f32.gmra.mxu0 %v164
    %v166 = vpop.f32.mrf.mxu0
    %v167 = vadd.f32 %v141, %v166
    %168 = vdwg.mxu0
    %169 = vmatpush.msra.mxu0 0.0
    %170 = vmatpush.msra.mxu0 0.0
    %171 = vmatpush.msra.mxu0 0.0
    %172 = vmatpush.msra.mxu0 0.0
    %173 = vmatpush.msra.mxu0 0.0
    %174 = vmatpush.msra.mxu0 0.0
    %175 = vmatpush.msra.mxu0 0.0
    %176 = vmatpush.msra.mxu0 0.0
    %177 = vmatpush.msra.mxu0 0.0
    %178 = vmatpush.msra.mxu0 0.0
    %179 = vmatpush.msra.mxu0 0.0
    %180 = vmatpush.msra.mxu0 0.0
    %181 = vmatpush.msra.mxu0 0.0
    %182 = vmatpush.msra.mxu0 0.0
    %183 = vmatpush.msra.mxu0 0.0
    %v184 = vand.u32 %v110, 4294901760
    %v185 = vsub.f32 %v110, %v184
    %186 = vmatpush.msra.mxu0 %v185
    %v187 = vand.u32 %v115, 4294901760
    %v188 = vsub.f32 %v115, %v187
    %189 = vmatmul.f32.gmra.mxu0 %v188
    %v190 = vpop.f32.mrf.mxu0
    %v191 = vadd.f32 %v167, %v190
    %192 = vdwg.mxu0
    %193 = vmatpush.msra.mxu0 0.0
    %194 = vmatpush.msra.mxu0 0.0
    %195 = vmatpush.msra.mxu0 0.0
    %196 = vmatpush.msra.mxu0 0.0
    %197 = vmatpush.msra.mxu0 0.0
    %198 = vmatpush.msra.mxu0 0.0
    %199 = vmatpush.msra.mxu0 0.0
    %200 = vmatpush.msra.mxu0 0.0
    %201 = vmatpush.msra.mxu0 0.0
    %202 = vmatpush.msra.mxu0 0.0
    %203 = vmatpush.msra.mxu0 0.0
    %204 = vmatpush.msra.mxu0 0.0
    %205 = vmatpush.msra.mxu0 0.0
    %206 = vmatpush.msra.mxu0 0.0
    %207 = vmatpush.msra.mxu0 0.0
    %v208 = vand.u32 %v110, 4294901760
    %209 = vmatpush.msra.mxu0 %v208
    %v210 = vand.u32 %v115, 4294901760
    %v211 = vsub.f32 %v115, %v210
    %v212 = vand.u32 %v211, 4294901760
    %213 = vmatmul.f32.gmra.mxu0 %v212
    %v214 = vpop.f32.mrf.mxu0
    %v215 = vadd.f32 %v191, %v214
    %216 = vdwg.mxu0
    %217 = vmatpush.msra.mxu0 0.0
    %218 = vmatpush.msra.mxu0 0.0
    %219 = vmatpush.msra.mxu0 0.0
    %220 = vmatpush.msra.mxu0 0.0
    %221 = vmatpush.msra.mxu0 0.0
    %222 = vmatpush.msra.mxu0 0.0
    %223 = vmatpush.msra.mxu0 0.0
    %224 = vmatpush.msra.mxu0 0.0
    %225 = vmatpush.msra.mxu0 0.0
    %226 = vmatpush.msra.mxu0 0.0
    %227 = vmatpush.msra.mxu0 0.0
    %228 = vmatpush.msra.mxu0 0.0
    %229 = vmatpush.msra.mxu0 0.0
    %230 = vmatpush.msra.mxu0 0.0
    %231 = vmatpush.msra.mxu0 0.0
    %v232 = vand.u32 %v110, 4294901760
    %v233 = vsub.f32 %v110, %v232
    %v234 = vand.u32 %v233, 4294901760
    %235 = vmatpush.msra.mxu0 %v234
    %v236 = vand.u32 %v115, 4294901760
    %237 = vmatmul.f32.gmra.mxu0 %v236
    %v238 = vpop.f32.mrf.mxu0
    %v239 = vadd.f32 %v215, %v238
    %240 = vdwg.mxu0
    %241 = vmatpush.msra.mxu0 0.0
    %242 = vmatpush.msra.mxu0 0.0
    %243 = vmatpush.msra.mxu0 0.0
    %244 = vmatpush.msra.mxu0 0.0
    %245 = vmatpush.msra.mxu0 0.0
    %246 = vmatpush.msra.mxu0 0.0
    %247 = vmatpush.msra.mxu0 0.0
    %248 = vmatpush.msra.mxu0 0.0
    %249 = vmatpush.msra.mxu0 0.0
    %250 = vmatpush.msra.mxu0 0.0
    %251 = vmatpush.msra.mxu0 0.0
    %252 = vmatpush.msra.mxu0 0.0
    %253 = vmatpush.msra.mxu0 0.0
    %254 = vmatpush.msra.mxu0 0.0
    %255 = vmatpush.msra.mxu0 0.0
    %v256 = vand.u32 %v110, 4294901760
    %257 = vmatpush.msra.mxu0 %v256
    %v258 = vand.u32 %v115, 4294901760
    %259 = vmatmul.f32.gmra.mxu0 %v258
    %v260 = vpop.f32.mrf.mxu0
    %v261 = vadd.f32 %v239, %v260
    %262 = vdwg.mxu0
    %v263 = vld [vmem:[#allocation7] sm:$0x1]
    %v265 = vsel %vm113, %v111, 0
    %267 = vmatpush.msra.mxu0 0.0
    %268 = vmatpush.msra.mxu0 0.0
    %269 = vmatpush.msra.mxu0 0.0
    %270 = vmatpush.msra.mxu0 0.0
    %271 = vmatpush.msra.mxu0 0.0
    %272 = vmatpush.msra.mxu0 0.0
    %273 = vmatpush.msra.mxu0 0.0
    %274 = vmatpush.msra.mxu0 0.0
    %275 = vmatpush.msra.mxu0 0.0
    %276 = vmatpush.msra.mxu0 0.0
    %277 = vmatpush.msra.mxu0 0.0
    %278 = vmatpush.msra.mxu0 0.0
    %279 = vmatpush.msra.mxu0 0.0
    %280 = vmatpush.msra.mxu0 0.0
    %281 = vmatpush.msra.mxu0 0.0
    %v282 = vand.u32 %v94, 4294901760
    %283 = vmatpush.msra.mxu0 %v282
    %v284 = vand.u32 %v265, 4294901760
    %v285 = vsub.f32 %v265, %v284
    %v286 = vand.u32 %v285, 4294901760
    %v287 = vsub.f32 %v285, %v286
    %v288 = vand.u32 %v287, 4294901760
    %289 = vmatmul.f32.gmra.mxu0 %v288
    %v290 = vpop.f32.mrf.mxu0
    %v291 = vadd.f32 %v261, %v290
    %292 = vdwg.mxu0
    %293 = vmatpush.msra.mxu0 0.0
    %294 = vmatpush.msra.mxu0 0.0
    %295 = vmatpush.msra.mxu0 0.0
    %296 = vmatpush.msra.mxu0 0.0
    %297 = vmatpush.msra.mxu0 0.0
    %298 = vmatpush.msra.mxu0 0.0
    %299 = vmatpush.msra.mxu0 0.0
    %300 = vmatpush.msra.mxu0 0.0
    %301 = vmatpush.msra.mxu0 0.0
    %302 = vmatpush.msra.mxu0 0.0
    %303 = vmatpush.msra.mxu0 0.0
    %304 = vmatpush.msra.mxu0 0.0
    %305 = vmatpush.msra.mxu0 0.0
    %306 = vmatpush.msra.mxu0 0.0
    %307 = vmatpush.msra.mxu0 0.0
    %v308 = vand.u32 %v94, 4294901760
    %v309 = vsub.f32 %v94, %v308
    %v310 = vand.u32 %v309, 4294901760
    %v311 = vsub.f32 %v309, %v310
    %v312 = vand.u32 %v311, 4294901760
    %313 = vmatpush.msra.mxu0 %v312
    %v314 = vand.u32 %v265, 4294901760
    %315 = vmatmul.f32.gmra.mxu0 %v314
    %v316 = vpop.f32.mrf.mxu0
    %v317 = vadd.f32 %v291, %v316
    %318 = vdwg.mxu0
    %319 = vmatpush.msra.mxu0 0.0
    %320 = vmatpush.msra.mxu0 0.0
    %321 = vmatpush.msra.mxu0 0.0
    %322 = vmatpush.msra.mxu0 0.0
    %323 = vmatpush.msra.mxu0 0.0
    %324 = vmatpush.msra.mxu0 0.0
    %325 = vmatpush.msra.mxu0 0.0
    %326 = vmatpush.msra.mxu0 0.0
    %327 = vmatpush.msra.mxu0 0.0
    %328 = vmatpush.msra.mxu0 0.0
    %329 = vmatpush.msra.mxu0 0.0
    %330 = vmatpush.msra.mxu0 0.0
    %331 = vmatpush.msra.mxu0 0.0
    %332 = vmatpush.msra.mxu0 0.0
    %333 = vmatpush.msra.mxu0 0.0
    %v334 = vand.u32 %v94, 4294901760
    %v335 = vsub.f32 %v94, %v334
    %336 = vmatpush.msra.mxu0 %v335
    %v337 = vand.u32 %v265, 4294901760
    %v338 = vsub.f32 %v265, %v337
    %339 = vmatmul.f32.gmra.mxu0 %v338
    %v340 = vpop.f32.mrf.mxu0
    %v341 = vadd.f32 %v317, %v340
    %342 = vdwg.mxu0
    %343 = vmatpush.msra.mxu0 0.0
    %344 = vmatpush.msra.mxu0 0.0
    %345 = vmatpush.msra.mxu0 0.0
    %346 = vmatpush.msra.mxu0 0.0
    %347 = vmatpush.msra.mxu0 0.0
    %348 = vmatpush.msra.mxu0 0.0
    %349 = vmatpush.msra.mxu0 0.0
    %350 = vmatpush.msra.mxu0 0.0
    %351 = vmatpush.msra.mxu0 0.0
    %352 = vmatpush.msra.mxu0 0.0
    %353 = vmatpush.msra.mxu0 0.0
    %354 = vmatpush.msra.mxu0 0.0
    %355 = vmatpush.msra.mxu0 0.0
    %356 = vmatpush.msra.mxu0 0.0
    %357 = vmatpush.msra.mxu0 0.0
    %v358 = vand.u32 %v94, 4294901760
    %359 = vmatpush.msra.mxu0 %v358
    %v360 = vand.u32 %v265, 4294901760
    %v361 = vsub.f32 %v265, %v360
    %v362 = vand.u32 %v361, 4294901760
    %363 = vmatmul.f32.gmra.mxu0 %v362
    %v364 = vpop.f32.mrf.mxu0
    %v365 = vadd.f32 %v341, %v364
    %366 = vdwg.mxu0
    %367 = vmatpush.msra.mxu0 0.0
    %368 = vmatpush.msra.mxu0 0.0
    %369 = vmatpush.msra.mxu0 0.0
    %370 = vmatpush.msra.mxu0 0.0
    %371 = vmatpush.msra.mxu0 0.0
    %372 = vmatpush.msra.mxu0 0.0
    %373 = vmatpush.msra.mxu0 0.0
    %374 = vmatpush.msra.mxu0 0.0
    %375 = vmatpush.msra.mxu0 0.0
    %376 = vmatpush.msra.mxu0 0.0
    %377 = vmatpush.msra.mxu0 0.0
    %378 = vmatpush.msra.mxu0 0.0
    %379 = vmatpush.msra.mxu0 0.0
    %380 = vmatpush.msra.mxu0 0.0
    %381 = vmatpush.msra.mxu0 0.0
    %v382 = vand.u32 %v94, 4294901760
    %v383 = vsub.f32 %v94, %v382
    %v384 = vand.u32 %v383, 4294901760
    %385 = vmatpush.msra.mxu0 %v384
    %v386 = vand.u32 %v265, 4294901760
    %387 = vmatmul.f32.gmra.mxu0 %v386
    %v388 = vpop.f32.mrf.mxu0
    %v389 = vadd.f32 %v365, %v388
    %390 = vdwg.mxu0
    %391 = vmatpush.msra.mxu0 0.0
    %392 = vmatpush.msra.mxu0 0.0
    %393 = vmatpush.msra.mxu0 0.0
    %394 = vmatpush.msra.mxu0 0.0
    %395 = vmatpush.msra.mxu0 0.0
    %396 = vmatpush.msra.mxu0 0.0
    %397 = vmatpush.msra.mxu0 0.0
    %398 = vmatpush.msra.mxu0 0.0
    %399 = vmatpush.msra.mxu0 0.0
    %400 = vmatpush.msra.mxu0 0.0
    %401 = vmatpush.msra.mxu0 0.0
    %402 = vmatpush.msra.mxu0 0.0
    %403 = vmatpush.msra.mxu0 0.0
    %404 = vmatpush.msra.mxu0 0.0
    %405 = vmatpush.msra.mxu0 0.0
    %v406 = vand.u32 %v94, 4294901760
    %407 = vmatpush.msra.mxu0 %v406
    %v408 = vand.u32 %v265, 4294901760
    %409 = vmatmul.f32.gmra.mxu0 %v408
    %v410 = vpop.f32.mrf.mxu0
    %v411 = vadd.f32 %v389, %v410
    %412 = vdwg.mxu0
    %v413 = vmul.f32 %v411, 0.5
    %v414 = vadd.f32 %v263, %v413
    %vm415 = vcmask 0
    %416 = vst.msk [vmem:[#allocation7] sm:$0x1] %vm415, %v414
    // Predicated region
    $region26: #{tpu_custom_call.1} parent=1 // pred_check
      _
    $region27: #{tpu_custom_call.1} parent=1 // pred_check_branch
      %418 = sbr.rel (0) target = $region29
    $region28: #{tpu_custom_call.1} parent=1 // pred_region
      %420 = vsyncadd [#allocation4], 0
      %s422 = sshll.u32 [#allocation7], 4
      %s423 = int_to_ptr.vmem [resolvable:$true] %s422
      %s424 = sshll.u32 %s3, 4
      %s425 = int_to_ptr.hbm [resolvable:$true] %s424
      %427 = dma.vmem_to_hbm [thread:$0]  %s423, 16, %s425, [#allocation4]
    $region29: #{tpu_custom_call.1} parent=1 // pred_fallthru
      _
    // Predicated region
    $region30: #{tpu_custom_call.1} parent=1 // pred_check
      _
    $region31: #{tpu_custom_call.1} parent=1 // pred_check_branch
      %429 = sbr.rel (0) target = $region33
    $region32: #{tpu_custom_call.1} parent=1 // pred_region
      %431 = dma.done [#allocation4], 16
    $region33: #{tpu_custom_call.1} parent=1 // pred_fallthru
      _
    %432 = vsyncpa [#allocation3], 1
    %433 = vsyncpa [#allocation6], 1
    %434 = vsyncpa [#allocation4], 1

</llo_original>
